<compile_context>
chip_gen: v5e
topology: v5e:2x2
jax: 0.10.0
libtpu: 0.0.40
codegen_flags: <defaults>
</compile_context>

<pallas_src>
import functools
from math import sqrt

import jax
import jax.numpy as jnp
from jax.experimental import pallas as pl
from jax.experimental.pallas import tpu as pltpu


def _round_up(x, m):
    return ((x + m - 1) // m) * m


def _sublane_multiple(dtype):
    # Native minimum sublane tile: 8 for 4-byte, 16 for 2-byte, 32 for 1-byte dtypes.
    return max(8, 32 // jnp.dtype(dtype).itemsize)


# ----------------------------------------------------------------------------
# Kernels
# ----------------------------------------------------------------------------
def _pg_linear_kernel_single_k(x_ref, w_ref, b_ref, o_ref, *, c):
    """dim_in fits a single K tile: one MXU pass + fused f32 epilogue.

    x_ref: (tm, tk)   w_ref: (tk, tn)  (pre-transposed weight)
    b_ref: (1, tn) f32   o_ref: (tm, tn)
    """
    acc = jnp.dot(x_ref[...], w_ref[...], preferred_element_type=jnp.float32)
    o_ref[...] = (acc * c + b_ref[...]).astype(o_ref.dtype)


def _pg_linear_kernel_multi_k_f32out(x_ref, w_ref, b_ref, o_ref, *, c):
    """K-tiled matmul; output is f32, so accumulate directly into o_ref
    (resident across the K axis) — no scratch, saves tm*tn*4 bytes of VMEM
    and a full-tile copy in the epilogue."""
    k = pl.program_id(2)

    @pl.when(k == 0)
    def _():
        o_ref[...] = jnp.zeros_like(o_ref)

    o_ref[...] += jnp.dot(x_ref[...], w_ref[...],
                          preferred_element_type=jnp.float32)

    @pl.when(k == pl.num_programs(2) - 1)
    def _():
        # He-init scale + bias folded into the f32 epilogue:
        #   (x * c) @ W.T + b == c * (x @ W.T) + b
        o_ref[...] = o_ref[...] * c + b_ref[...]


def _pg_linear_kernel_multi_k_acc(x_ref, w_ref, b_ref, o_ref, acc_ref, *, c):
    """K-tiled matmul with a separate f32 accumulator (low-precision outputs)."""
    k = pl.program_id(2)

    @pl.when(k == 0)
    def _():
        acc_ref[...] = jnp.zeros_like(acc_ref)

    acc_ref[...] += jnp.dot(x_ref[...], w_ref[...],
                            preferred_element_type=jnp.float32)

    @pl.when(k == pl.num_programs(2) - 1)
    def _():
        o_ref[...] = (acc_ref[...] * c + b_ref[...]).astype(o_ref.dtype)


# ----------------------------------------------------------------------------
# Wrapper
# ----------------------------------------------------------------------------
def pg_linear(x, weight, bias, gain=sqrt(2.0), *, tm=512, tn=512, tk=512,
              compute_dtype=None, force_pallas=None):
    """PGLinear forward.

    x:      [N, dim_in]
    weight: [dim_out, dim_in]  (PyTorch Linear convention)
    bias:   [dim_out]
    returns [N, dim_out] in x's (compute) dtype.

    compute_dtype: optionally cast x/weight (e.g. jnp.bfloat16) for the
      MXU-native path; accumulation and the c/bias epilogue stay in f32.
    force_pallas: True/False to force the path; None uses a small-shape
      heuristic (tiny problems dispatch to plain jnp.dot).
    """
    n, dim_in = x.shape
    dim_out, dim_in_w = weight.shape
    assert dim_in_w == dim_in, "weight must be [dim_out, dim_in]"
    c = float(gain) / sqrt(dim_in)

    if compute_dtype is not None:
        x = x.astype(compute_dtype)
        weight = weight.astype(compute_dtype)
    out_dtype = x.dtype

    # Tiny-shape fallback: pad/slice copies + pallas_call fixed overhead dominate.
    use_pallas = force_pallas
    if use_pallas is None:
        use_pallas = (2 * n * dim_in * dim_out) >= (1 << 22)
    if not use_pallas:
        acc = jnp.dot(x, weight.T, preferred_element_type=jnp.float32)
        return (acc * c + bias.astype(jnp.float32)).astype(out_dtype)

    # Clamp tiles for small shapes, honoring dtype-native sublane (8/16/32) and
    # 128-lane layout constraints.
    sub = _sublane_multiple(out_dtype)
    tm = _round_up(min(tm, _round_up(n, sub)), sub)
    tk = _round_up(min(tk, _round_up(dim_in, 128)), 128)
    tn = _round_up(min(tn, _round_up(dim_out, 128)), 128)

    m_pad = _round_up(n, tm)
    k_pad = _round_up(dim_in, tk)
    n_pad = _round_up(dim_out, tn)

    # One-time layout transform of the *static* parameters: transpose the weight
    # to [dim_in, dim_out] so tiles are contracted with a plain dot (no trans_b),
    # and zero-pad to tile multiples (zero K padding adds nothing; padded N
    # columns are sliced off).  In a real model, hoist this block to init time.
    # TODO(synk): expose a prepare-once API so the transpose/pad isn't traced per call.
    w_t = weight.T
    xp = x
    if (m_pad, k_pad) != (n, dim_in):
        xp = jnp.pad(x, ((0, m_pad - n), (0, k_pad - dim_in)))
    wp = w_t
    if (k_pad, n_pad) != (dim_in, dim_out):
        wp = jnp.pad(w_t, ((0, k_pad - dim_in), (0, n_pad - dim_out)))
    bp = bias.astype(jnp.float32)
    if n_pad != dim_out:
        bp = jnp.pad(bp, (0, n_pad - dim_out))
    bp = bp.reshape(1, n_pad)

    if k_pad == tk:
        # ---- Single-K fast path (common PGLinear regime: small dim_in) ----
        # Grid ordered (N tiles outer, M tiles inner); weight block index depends
        # only on the outer axis, so each weight panel is DMA'd exactly once.
        kernel = functools.partial(_pg_linear_kernel_single_k, c=c)
        out = pl.pallas_call(
            kernel,
            out_shape=jax.ShapeDtypeStruct((m_pad, n_pad), out_dtype),
            grid=(n_pad // tn, m_pad // tm),
            in_specs=[
                pl.BlockSpec((tm, tk), lambda j, i: (i, 0)),   # x tile
                pl.BlockSpec((tk, tn), lambda j, i: (0, j)),   # weight.T panel
                pl.BlockSpec((1, tn), lambda j, i: (0, j)),    # f32 bias row
            ],
            out_specs=pl.BlockSpec((tm, tn), lambda j, i: (i, j)),
            compiler_params=pltpu.CompilerParams(
                dimension_semantics=("parallel", "parallel"),
            ),
        )(xp, wp, bp)
    else:
        # ---- K-tiled path ----
        grid = (m_pad // tm, n_pad // tn, k_pad // tk)
        in_specs = [
            pl.BlockSpec((tm, tk), lambda i, j, k: (i, k)),    # x tile
            pl.BlockSpec((tk, tn), lambda i, j, k: (k, j)),    # weight.T tile
            pl.BlockSpec((1, tn), lambda i, j, k: (0, j)),     # f32 bias row
        ]
        out_spec = pl.BlockSpec((tm, tn), lambda i, j, k: (i, j))
        cp = pltpu.CompilerParams(
            dimension_semantics=("parallel", "parallel", "arbitrary"),
        )
        if jnp.dtype(out_dtype) == jnp.dtype(jnp.float32):
            kernel = functools.partial(_pg_linear_kernel_multi_k_f32out, c=c)
            out = pl.pallas_call(
                kernel,
                out_shape=jax.ShapeDtypeStruct((m_pad, n_pad), out_dtype),
                grid=grid,
                in_specs=in_specs,
                out_specs=out_spec,
                compiler_params=cp,
            )(xp, wp, bp)
        else:
            kernel = functools.partial(_pg_linear_kernel_multi_k_acc, c=c)
            out = pl.pallas_call(
                kernel,
                out_shape=jax.ShapeDtypeStruct((m_pad, n_pad), out_dtype),
                grid=grid,
                in_specs=in_specs,
                out_specs=out_spec,
                scratch_shapes=[pltpu.VMEM((tm, tn), jnp.float32)],
                compiler_params=cp,
            )(xp, wp, bp)

    if (m_pad, n_pad) != (n, dim_out):
        out = out[:n, :dim_out]
    return out


# ----------------------------------------------------------------------------
# Self-test
# ----------------------------------------------------------------------------
if __name__ == "__main__":
    GAIN = sqrt(2.0)
    key = jax.random.PRNGKey(0)
    kx, kw, kx2, kw2 = jax.random.split(key, 4)

    # Demo shape consistent with the module (latent -> first 4x4 block input):
    # batch=8, dim_in=32, dim_out=64.
    N, DIM_IN, DIM_OUT = 8, 32, 64
    x = jax.random.normal(kx, (N, DIM_IN), dtype=jnp.float32)
    weight = jax.random.normal(kw, (DIM_OUT, DIM_IN), dtype=jnp.float32)  # normal_(W,0,1)
    bias = jnp.zeros((DIM_OUT,), dtype=jnp.float32)                       # PG_bias zeros

    c = GAIN / sqrt(DIM_IN)
    ref = (x * c) @ weight.T + bias

    # 1) Single-K Pallas fast path (dim_in fits one K tile).
    out = jax.block_until_ready(
        pg_linear(x, weight, bias, gain=GAIN, force_pallas=True))
    assert out.shape == (N, DIM_OUT)
    assert jnp.allclose(out, ref, atol=1e-5, rtol=1e-5), "single-K path mismatch"

    # 2) Multi-K Pallas path (f32 accumulates directly into the output tile).
    N2, DIM_IN2, DIM_OUT2 = 16, 256, 128
    x2 = jax.random.normal(kx2, (N2, DIM_IN2), dtype=jnp.float32)
    w2 = jax.random.normal(kw2, (DIM_OUT2, DIM_IN2), dtype=jnp.float32)
    b2 = jnp.zeros((DIM_OUT2,), dtype=jnp.float32)
    c2 = GAIN / sqrt(DIM_IN2)
    ref2 = (x2 * c2) @ w2.T + b2

    out2 = jax.block_until_ready(
        pg_linear(x2, w2, b2, gain=GAIN, force_pallas=True, tm=16, tn=128, tk=128))
    assert out2.shape == (N2, DIM_OUT2)
    assert jnp.allclose(out2, ref2, atol=1e-4, rtol=1e-4), "multi-K f32 path mismatch"

    # 3) Multi-K Pallas path with bf16 compute (scratch f32 accumulator kernel).
    out3 = jax.block_until_ready(
        pg_linear(x2, w2, b2, gain=GAIN, force_pallas=True,
                  tm=16, tn=128, tk=128, compute_dtype=jnp.bfloat16))
    assert out3.shape == (N2, DIM_OUT2)
    assert jnp.allclose(out3.astype(jnp.float32), ref2, atol=1e-1, rtol=5e-2), \
        "multi-K bf16 path mismatch"

    # 4) Tiny-shape heuristic fallback (plain jnp.dot) still matches.
    out4 = jax.block_until_ready(pg_linear(x, weight, bias, gain=GAIN))
    assert jnp.allclose(out4, ref, atol=1e-5, rtol=1e-5), "fallback path mismatch"

    print("KERNEL_OK")
</pallas_src>

<mosaic_0001>
module attributes {stable_mosaic.version = 11 : i64} {
  func.func @_pg_linear_kernel_single_k(%arg0: i32, %arg1: i32, %arg2: memref<8x128xf32, #tpu.memory_space<vmem>>, %arg3: memref<128x128xf32, #tpu.memory_space<vmem>>, %arg4: memref<1x128xf32, #tpu.memory_space<vmem>>, %arg5: memref<8x128xf32, #tpu.memory_space<vmem>>) attributes {dimension_semantics = [#tpu.dimension_semantics<parallel>, #tpu.dimension_semantics<parallel>], iteration_bounds = array<i64: 1, 1>, scalar_prefetch = 0 : i64, scratch_operands = 0 : i64, tpu.core_type = #tpu.core_type<tc>, window_params = [{transform_indices = @transform_0, window_bounds = array<i64: 8, 128>}, {transform_indices = @transform_1, window_bounds = array<i64: 128, 128>}, {transform_indices = @transform_2, window_bounds = array<i64: 1, 128>}, {transform_indices = @transform_3, window_bounds = array<i64: 8, 128>}]} {
    %c0 = arith.constant 0 : index
    %c0_0 = arith.constant 0 : index
    %0 = vector.load %arg2[%c0, %c0_0] : memref<8x128xf32, #tpu.memory_space<vmem>>, vector<8x128xf32>
    %c0_1 = arith.constant 0 : index
    %c0_2 = arith.constant 0 : index
    %1 = vector.load %arg3[%c0_1, %c0_2] : memref<128x128xf32, #tpu.memory_space<vmem>>, vector<128x128xf32>
    %cst = arith.constant dense<0.000000e+00> : vector<8x128xf32>
    %2 = tpu.matmul %0, %1, %cst {dimension_numbers = #tpu.dot_dimension_numbers<[1], [0], [0], [1], [0, 0, 1, 1], [], []>} : vector<8x128xf32>, vector<128x128xf32>, vector<8x128xf32> -> vector<8x128xf32>
    %cst_3 = arith.constant 2.500000e-01 : f32
    %3 = vector.broadcast %cst_3 : f32 to vector<8x128xf32>
    %4 = arith.mulf %2, %3 : vector<8x128xf32>
    %c0_4 = arith.constant 0 : index
    %c0_5 = arith.constant 0 : index
    %5 = vector.load %arg4[%c0_4, %c0_5] : memref<1x128xf32, #tpu.memory_space<vmem>>, vector<1x128xf32>
    %6 = vector.broadcast %5 : vector<1x128xf32> to vector<8x128xf32>
    %7 = arith.addf %4, %6 : vector<8x128xf32>
    %c0_6 = arith.constant 0 : index
    %c0_7 = arith.constant 0 : index
    %8 = vector.load %arg5[%c0_6, %c0_7] : memref<8x128xf32, #tpu.memory_space<vmem>>, vector<8x128xf32>
    tpu.vector_store %arg5[%c0_6, %c0_7], %7 {strides = array<i32>} : memref<8x128xf32, #tpu.memory_space<vmem>>, vector<8x128xf32>,
    return
  }
  func.func @transform_0(%arg0: i32, %arg1: i32) -> (i32, i32) {
    %c0_i32 = arith.constant 0 : i32
    %c0_i32_0 = arith.constant 0 : i32
    return %arg1, %c0_i32 : i32, i32
  }
  func.func @transform_1(%arg0: i32, %arg1: i32) -> (i32, i32) {
    %c0_i32 = arith.constant 0 : i32
    %c0_i32_0 = arith.constant 0 : i32
    return %c0_i32, %arg0 : i32, i32
  }
  func.func @transform_2(%arg0: i32, %arg1: i32) -> (i32, i32) {
    %c0_i32 = arith.constant 0 : i32
    %c0_i32_0 = arith.constant 0 : i32
    return %c0_i32, %arg0 : i32, i32
  }
  func.func @transform_3(%arg0: i32, %arg1: i32) -> (i32, i32) {
    %c0_i32 = arith.constant 0 : i32
    return %arg1, %arg0 : i32, i32
  }
}

</mosaic_0001>

<llo_original>
// kernel: tpu_custom_call.1
$region0: #{tpu_custom_call.1}
  #allocation0 [shape = 'u32[]', space=smem, size = 0x4, offset = 0x4, fixed_abs, tag = 'smem constant byte address 0x4 - core index']
  #allocation1 [shape = 'u32[72,128]{1,0:T(1,128)}', space=vmem, size = 0x9000, scoped, tag = 'internal scratch']
  %s0 = inlined_call_operand.hbm [shape: f32[8,128], index: 0, kind: input, shape index: {}]
  %s1 = inlined_call_operand.hbm [shape: f32[128,128], index: 1, kind: input, shape index: {}]
  %s2 = inlined_call_operand.vmem [shape: f32[1,128], index: 2, kind: input, shape index: {}]
  %s3 = inlined_call_operand.hbm [shape: f32[8,128], index: 3, kind: output, shape index: {}]
  %s4 = sld [smem:[#allocation0]]
  $region30: #{tpu_custom_call.1} parent=0
    _
  %s6 = ssub.s32 1, %s4
  %s7 = scalar_select 0, %s6, %s4
  $region1: #{tpu_custom_call.1} parent=0
    #allocation2 [shape = 'u8[4096]{0}', space=vmem, size = 0x1000, scoped, tag = 'input window, operand 0, single buffered']
    #allocation3 [shape = 's32[1]{0}', space=sflag, size = 0x4, scoped, tag = 'scoped memory for tpu_custom_call.1']
    #allocation4 [shape = 's32[1]{0}', space=sflag, size = 0x4, scoped, tag = 'scoped memory for tpu_custom_call.1']
    #allocation5 [shape = 'u8[65536]{0}', space=vmem, size = 0x10000, scoped, tag = 'input window, operand 1, single buffered']
    #allocation6 [shape = 's32[1]{0}', space=sflag, size = 0x4, scoped, tag = 'scoped memory for tpu_custom_call.1']
    #allocation7 [shape = 'u8[4096]{0}', space=vmem, size = 0x1000, scoped, tag = 'output window, operand 0, single buffered']
    %8 = vsyncpa [#allocation3], 0
    %9 = vsyncpa [#allocation6], 0
    %10 = vsyncpa [#allocation4], 0
    // Predicated region
    $region2: #{tpu_custom_call.1} parent=1 // pred_check
      _
    $region3: #{tpu_custom_call.1} parent=1 // pred_check_branch
      %12 = sbr.rel (0) target = $region5
    $region4: #{tpu_custom_call.1} parent=1 // pred_region
      %14 = vsyncadd [#allocation3], 0
      %s16 = sshll.u32 %s0, 4
      %s17 = int_to_ptr.hbm [resolvable:$true] %s16
      %s18 = sshll.u32 [#allocation2], 4
      %s19 = int_to_ptr.vmem [resolvable:$true] %s18
      %21 = dma.hbm_to_vmem [thread:$0]  %s17, 128, %s19, [#allocation3]
    $region5: #{tpu_custom_call.1} parent=1 // pred_fallthru
      _
    // Predicated region
    $region6: #{tpu_custom_call.1} parent=1 // pred_check
      _
    $region7: #{tpu_custom_call.1} parent=1 // pred_check_branch
      %23 = sbr.rel (0) target = $region9
    $region8: #{tpu_custom_call.1} parent=1 // pred_region
      %25 = vsyncadd [#allocation6], 0
      %s26 = sshll.u32 %s1, 4
      %s27 = int_to_ptr.hbm [resolvable:$true] %s26
      %s28 = sshll.u32 [#allocation5], 4
      %s29 = int_to_ptr.vmem [resolvable:$true] %s28
      %34 = dma.hbm_to_vmem [thread:$0]  %s27, 2048, %s29, [#allocation6], 128, 128, 8
    $region9: #{tpu_custom_call.1} parent=1 // pred_fallthru
      _
    // Predicated region
    $region10: #{tpu_custom_call.1} parent=1 // pred_check
      _
    $region11: #{tpu_custom_call.1} parent=1 // pred_check_branch
      %36 = sbr.rel (0) target = $region13
    $region12: #{tpu_custom_call.1} parent=1 // pred_region
      _
    $region13: #{tpu_custom_call.1} parent=1 // pred_fallthru
      _
    // Predicated region
    $region14: #{tpu_custom_call.1} parent=1 // pred_check
      _
    $region15: #{tpu_custom_call.1} parent=1 // pred_check_branch
      %38 = sbr.rel (0) target = $region17
    $region16: #{tpu_custom_call.1} parent=1 // pred_region
      %40 = dma.done [#allocation3], 128
    $region17: #{tpu_custom_call.1} parent=1 // pred_fallthru
      _
    // Predicated region
    $region18: #{tpu_custom_call.1} parent=1 // pred_check
      _
    $region19: #{tpu_custom_call.1} parent=1 // pred_check_branch
      %42 = sbr.rel (0) target = $region21
    $region20: #{tpu_custom_call.1} parent=1 // pred_region
      %44 = dma.done [#allocation6], 2048
    $region21: #{tpu_custom_call.1} parent=1 // pred_fallthru
      _
    %v45 = vld [vmem:[#allocation2] sm:$0xff]
    %v46 = vld [vmem:[#allocation5] sm:$0xff]
    %v47 = vld [vmem:[#allocation5 + $0x8] sm:$0xff]
    %v48 = vld [vmem:[#allocation5 + $0x10] sm:$0xff]
    %v49 = vld [vmem:[#allocation5 + $0x18] sm:$0xff]
    %v50 = vld [vmem:[#allocation5 + $0x20] sm:$0xff]
    %v51 = vld [vmem:[#allocation5 + $0x28] sm:$0xff]
    %v52 = vld [vmem:[#allocation5 + $0x30] sm:$0xff]
    %v53 = vld [vmem:[#allocation5 + $0x38] sm:$0xff]
    %v54 = vld [vmem:[#allocation5 + $0x40] sm:$0xff]
    %v55 = vld [vmem:[#allocation5 + $0x48] sm:$0xff]
    %v56 = vld [vmem:[#allocation5 + $0x50] sm:$0xff]
    %v57 = vld [vmem:[#allocation5 + $0x58] sm:$0xff]
    %v58 = vld [vmem:[#allocation5 + $0x60] sm:$0xff]
    %v59 = vld [vmem:[#allocation5 + $0x68] sm:$0xff]
    %v60 = vld [vmem:[#allocation5 + $0x70] sm:$0xff]
    %v61 = vld [vmem:[#allocation5 + $0x78] sm:$0xff]
    %62 = vmatpush.msra.mxu0 %v61
    %63 = vmatpush.msra.mxu0 %v60
    %64 = vmatpush.msra.mxu0 %v59
    %65 = vmatpush.msra.mxu0 %v58
    %66 = vmatpush.msra.mxu0 %v57
    %67 = vmatpush.msra.mxu0 %v56
    %68 = vmatpush.msra.mxu0 %v55
    %69 = vmatpush.msra.mxu0 %v54
    %70 = vmatpush.msra.mxu0 %v53
    %71 = vmatpush.msra.mxu0 %v52
    %72 = vmatpush.msra.mxu0 %v51
    %73 = vmatpush.msra.mxu0 %v50
    %74 = vmatpush.msra.mxu0 %v49
    %75 = vmatpush.msra.mxu0 %v48
    %76 = vmatpush.msra.mxu0 %v47
    %77 = vmatpush.msra.mxu0 %v46
    %78 = vmatmul.f32.gmra.mxu0 %v45
    %v79 = vpop.f32.mrf.mxu0
    %v80 = vadd.f32 0.0, %v79
    %81 = vdwg.mxu0
    %v82 = vmul.f32 %v80, 0.25
    %v83 = vld [vmem:[%s2] sm:$0x1]
    %v85 = vperm.slane %v83, 0
    %v87 = vadd.f32 %v82, %v85
    %88 = vst [vmem:[#allocation7] sm:$0xff] %v87
    // Predicated region
    $region22: #{tpu_custom_call.1} parent=1 // pred_check
      _
    $region23: #{tpu_custom_call.1} parent=1 // pred_check_branch
      %90 = sbr.rel (0) target = $region25
    $region24: #{tpu_custom_call.1} parent=1 // pred_region
      %92 = vsyncadd [#allocation4], 0
      %s94 = sshll.u32 [#allocation7], 4
      %s95 = int_to_ptr.vmem [resolvable:$true] %s94
      %s96 = sshll.u32 %s3, 4
      %s97 = int_to_ptr.hbm [resolvable:$true] %s96
      %99 = dma.vmem_to_hbm [thread:$0]  %s95, 128, %s97, [#allocation4]
    $region25: #{tpu_custom_call.1} parent=1 // pred_fallthru
      _
    // Predicated region
    $region26: #{tpu_custom_call.1} parent=1 // pred_check
      _
    $region27: #{tpu_custom_call.1} parent=1 // pred_check_branch
      %101 = sbr.rel (0) target = $region29
    $region28: #{tpu_custom_call.1} parent=1 // pred_region
      %103 = dma.done [#allocation4], 128
    $region29: #{tpu_custom_call.1} parent=1 // pred_fallthru
      _
    %104 = vsyncpa [#allocation3], 1
    %105 = vsyncpa [#allocation6], 1
    %106 = vsyncpa [#allocation4], 1

</llo_original>
